<compile_context>
chip_gen: v5e
topology: v5e:2x2
jax: 0.10.0
libtpu: 0.0.40
codegen_flags: <defaults>
</compile_context>

<pallas_src>
import functools

import jax
import jax.numpy as jnp
from jax.experimental import pallas as pl
from jax.experimental.pallas import tpu as pltpu


def _round_up(x, m):
    return (x + m - 1) // m * m


# ------------------------------ Pallas kernel -------------------------------

def _pcb_highdiv_kernel(x_ref, w1_ref, w2_ref, o_ref, *, order, c_int):
    """One (C, TN) NCHW tile of the fused module.

    x_ref : (1, C, TN)        f32   activation tile (spatial on the lane axis)
    w1_ref: (n1*c_int, C)     bf16  first-stage 1x1 convs stacked row-wise in
                                    PyTorch registration order 'order{o}_{j+1}_{i+1}'
    w2_ref: (order, C, c_int) bf16  'convb{o}_{j+1}' weights
    o_ref : (1, C, TN)        f32
    """
    x = x_ref[0]                                   # (C, TN) f32
    xb = x.astype(jnp.bfloat16)

    # ONE wide first-stage matmul: (n1*c_int, C) @ (C, TN) -> (n1*c_int, TN).
    y_all = jnp.dot(w1_ref[...], xb, preferred_element_type=jnp.float32)

    gate = jnp.zeros_like(x)
    cnt = 0
    for j in range(order):
        # static, sublane-aligned row slices (c_int = multiple of 8)
        y_prod = y_all[cnt * c_int:(cnt + 1) * c_int, :]
        cnt += 1
        for _ in range(j):
            y_prod = y_prod * y_all[cnt * c_int:(cnt + 1) * c_int, :]
            cnt += 1
        y_rel = jnp.maximum(y_prod, 0.0).astype(jnp.bfloat16)
        z = jnp.dot(w2_ref[j], y_rel, preferred_element_type=jnp.float32)
        # sigmoid: exp + approximate reciprocal both run on the EUP slot.
        gate = gate + pl.reciprocal(1.0 + jnp.exp(-z), approx=True)

    o_ref[0] = x * gate * (1.0 / float(order))


# ------------------------------ wrapper --------------------------------------

def _pick_tile_hw(hw, c, *, target=2048, tile_budget_bytes=12 << 20):
    """Largest 128-multiple spatial tile <= target that keeps the
    double-buffered f32 in+out tiles (2 bufs * 2 arrays * 4 B) in budget."""
    max_by_vmem = max(128, (tile_budget_bytes // (16 * c)) // 128 * 128)
    cap = max(128, min(target, max_by_vmem))
    if hw <= cap:
        return _round_up(hw, 128)
    for cand in range(cap, 127, -128):     # prefer a divisor -> no pad round trip
        if hw % cand == 0:
            return cand
    return cap


def pcb_highdiv_forward(x_nchw, params, *, order, tile_hw=2048):
    """NCHW f32 in, NCHW f32 out; fused PCBHighDivModule forward."""
    b, c, h, w = x_nchw.shape
    w1 = params["w1"]                              # (n1, c_int, C)   conv weights
    w2 = params["w2"]                              # (order, C, c_int)
    n1, c_int, _ = w1.shape
    w1p = w1.reshape(n1 * c_int, c).astype(jnp.bfloat16)   # lane-dense (.., C)
    w2b = w2.astype(jnp.bfloat16)

    hw = h * w
    x3 = x_nchw.astype(jnp.float32).reshape(b, c, hw)      # free reshape, stays NCHW
    tn = _pick_tile_hw(hw, c, target=tile_hw)
    hw_p = _round_up(hw, tn)
    if hw_p != hw:
        # TODO(synk): replace this one-time pad/slice with a pl.when-masked
        # ragged last tile for spatial sizes that aren't 128-aligned.
        x3 = jnp.pad(x3, ((0, 0), (0, 0), (0, hw_p - hw)))

    grid = (b, hw_p // tn)
    m = b * hw_p
    tile_bytes = 2 * 2 * c * tn * 4                # double-buffered f32 in+out tiles
    weight_bytes = (w1p.size + w2b.size) * 2
    vmem_limit = int(min(64 << 20, max(24 << 20, 3 * tile_bytes + 4 * weight_bytes)))

    cost = pl.CostEstimate(
        flops=2 * m * c * c_int * (n1 + order),
        transcendentals=m * c * order,
        bytes_accessed=2 * m * c * 4 + weight_bytes)

    out3 = pl.pallas_call(
        functools.partial(_pcb_highdiv_kernel, order=order, c_int=c_int),
        out_shape=jax.ShapeDtypeStruct((b, c, hw_p), jnp.float32),
        grid=grid,
        in_specs=[
            pl.BlockSpec((1, c, tn), lambda ib, it: (ib, 0, it)),
            pl.BlockSpec((n1 * c_int, c), lambda ib, it: (0, 0)),        # resident
            pl.BlockSpec((order, c, c_int), lambda ib, it: (0, 0, 0)),   # resident
        ],
        out_specs=pl.BlockSpec((1, c, tn), lambda ib, it: (ib, 0, it)),
        compiler_params=pltpu.CompilerParams(
            dimension_semantics=("parallel", "parallel"),   # megacore on v7x
            vmem_limit_bytes=vmem_limit),
        cost_estimate=cost,
    )(x3, w1p, w2b)

    if hw_p != hw:
        out3 = out3[:, :, :hw]
    return out3.reshape(b, c, h, w)


# ------------------------ params & pure-JAX reference ------------------------

def init_pcb_highdiv_params(key, in_channels, order):
    inter = in_channels // 8 * 2
    n1 = order * (order + 1) // 2
    k1, k2 = jax.random.split(key)
    w1 = (jax.random.normal(k1, (n1, inter, in_channels), jnp.float32)
          * (2.0 / in_channels) ** 0.5)            # conv weight (out=inter, in=C)
    w2 = (jax.random.normal(k2, (order, in_channels, inter), jnp.float32)
          * (2.0 / inter) ** 0.5)                  # conv weight (out=C, in=inter)
    return {"w1": w1, "w2": w2}


def pcb_highdiv_reference(x_nchw, params, order):
    """Pure-JAX mirror of PCBHighDivModule.forward (same bf16 matmul casts)."""
    x = x_nchw.astype(jnp.float32)
    xb = x.astype(jnp.bfloat16)
    w1 = params["w1"].astype(jnp.bfloat16)         # (n1, c_int, C)
    w2 = params["w2"].astype(jnp.bfloat16)         # (order, C, c_int)
    gate = jnp.zeros_like(x)
    cnt = 0
    for j in range(order):
        y_prod = None
        for _ in range(j + 1):
            yi = jnp.einsum("bchw,dc->bdhw", xb, w1[cnt],
                            preferred_element_type=jnp.float32)
            y_prod = yi if y_prod is None else y_prod * yi
            cnt += 1
        y_rel = jnp.maximum(y_prod, 0.0).astype(jnp.bfloat16)
        z = jnp.einsum("bdhw,cd->bchw", y_rel, w2[j],
                       preferred_element_type=jnp.float32)
        gate = gate + 1.0 / (1.0 + jnp.exp(-z))
    return x * gate / order


# ----------------------------------- main ------------------------------------

if __name__ == "__main__":
    order = 2
    in_channels = 128            # inter_channels = in_channels // 8 * 2 = 32
    B, H, W = 2, 16, 16          # H*W = 256 -> grid (2, 1): 2 parallel steps

    key = jax.random.PRNGKey(0)
    k_param, k_x = jax.random.split(key)
    params = init_pcb_highdiv_params(k_param, in_channels, order)
    x = jax.random.normal(k_x, (B, in_channels, H, W), jnp.float32)

    fwd = jax.jit(functools.partial(pcb_highdiv_forward, order=order))
    y = jax.block_until_ready(fwd(x, params))

    assert y.shape == x.shape, y.shape
    assert y.dtype == jnp.float32
    assert bool(jnp.all(jnp.isfinite(y)))

    y_ref = pcb_highdiv_reference(x, params, order)
    max_err = float(jnp.max(jnp.abs(y - y_ref)))
    assert max_err < 3e-2, max_err

    print("KERNEL_OK")
</pallas_src>

<mosaic_0001>
module attributes {stable_mosaic.version = 11 : i64} {
  func.func @_pcb_highdiv_kernel(%arg0: i32, %arg1: i32, %arg2: memref<1x128x256xf32, #tpu.memory_space<vmem>>, %arg3: memref<96x128xbf16, #tpu.memory_space<vmem>>, %arg4: memref<2x128x32xbf16, #tpu.memory_space<vmem>>, %arg5: memref<1x128x256xf32, #tpu.memory_space<vmem>>) attributes {dimension_semantics = [#tpu.dimension_semantics<parallel>, #tpu.dimension_semantics<parallel>], iteration_bounds = array<i64: 2, 1>, scalar_prefetch = 0 : i64, scratch_operands = 0 : i64, tpu.core_type = #tpu.core_type<tc>, window_params = [{transform_indices = @transform_0, window_bounds = array<i64: 1, 128, 256>}, {pipeline_mode = #tpu.pipeline_mode<synchronous>, transform_indices = @transform_1, window_bounds = array<i64: 96, 128>}, {pipeline_mode = #tpu.pipeline_mode<synchronous>, transform_indices = @transform_2, window_bounds = array<i64: 2, 128, 32>}, {transform_indices = @transform_3, window_bounds = array<i64: 1, 128, 256>}]} {
    %c0 = arith.constant 0 : index
    %c0_0 = arith.constant 0 : index
    %c0_1 = arith.constant 0 : index
    %0 = vector.load %arg2[%c0, %c0_0, %c0_1] : memref<1x128x256xf32, #tpu.memory_space<vmem>>, vector<1x128x256xf32>
    %1 = vector.shape_cast %0 : vector<1x128x256xf32> to vector<128x256xf32>
    %2 = arith.truncf %1 : vector<128x256xf32> to vector<128x256xbf16>
    %c0_2 = arith.constant 0 : index
    %c0_3 = arith.constant 0 : index
    %3 = vector.load %arg3[%c0_2, %c0_3] : memref<96x128xbf16, #tpu.memory_space<vmem>>, vector<96x128xbf16>
    %cst = arith.constant dense<0.000000e+00> : vector<96x256xf32>
    %4 = tpu.matmul %3, %2, %cst {dimension_numbers = #tpu.dot_dimension_numbers<[1], [0], [0], [1], [0, 0, 1, 1], [], []>} : vector<96x128xbf16>, vector<128x256xbf16>, vector<96x256xf32> -> vector<96x256xf32>
    %cst_4 = arith.constant 0.000000e+00 : f32
    %5 = vector.broadcast %cst_4 : f32 to vector<128x256xf32>
    %6 = vector.extract_strided_slice %4 {offsets = [0, 0], sizes = [32, 256], strides = [1, 1]} : vector<96x256xf32> to vector<32x256xf32>
    %cst_5 = arith.constant 0.000000e+00 : f32
    %7 = vector.broadcast %cst_5 : f32 to vector<32x256xf32>
    %8 = arith.maximumf %6, %7 : vector<32x256xf32>
    %9 = arith.truncf %8 : vector<32x256xf32> to vector<32x256xbf16>
    %c0_6 = arith.constant 0 : index
    %c0_7 = arith.constant 0 : index
    %c0_8 = arith.constant 0 : index
    %10 = vector.load %arg4[%c0_6, %c0_7, %c0_8] : memref<2x128x32xbf16, #tpu.memory_space<vmem>>, vector<1x128x32xbf16>
    %11 = vector.shape_cast %10 : vector<1x128x32xbf16> to vector<128x32xbf16>
    %cst_9 = arith.constant dense<0.000000e+00> : vector<128x256xf32>
    %12 = tpu.matmul %11, %9, %cst_9 {dimension_numbers = #tpu.dot_dimension_numbers<[1], [0], [0], [1], [0, 0, 1, 1], [], []>} : vector<128x32xbf16>, vector<32x256xbf16>, vector<128x256xf32> -> vector<128x256xf32>
    %cst_10 = arith.constant 0.000000e+00 : f32
    %13 = vector.broadcast %cst_10 : f32 to vector<128x256xf32>
    %14 = arith.subf %13, %12 : vector<128x256xf32>
    %15 = math.exp %14 : vector<128x256xf32>
    %cst_11 = arith.constant 1.000000e+00 : f32
    %16 = vector.broadcast %cst_11 : f32 to vector<128x256xf32>
    %17 = arith.addf %16, %15 : vector<128x256xf32>
    %18 = tpu.reciprocal %17 {approx = true} : vector<128x256xf32> -> vector<128x256xf32>
    %19 = arith.addf %5, %18 : vector<128x256xf32>
    %20 = vector.extract_strided_slice %4 {offsets = [32, 0], sizes = [32, 256], strides = [1, 1]} : vector<96x256xf32> to vector<32x256xf32>
    %21 = vector.extract_strided_slice %4 {offsets = [64, 0], sizes = [32, 256], strides = [1, 1]} : vector<96x256xf32> to vector<32x256xf32>
    %22 = arith.mulf %20, %21 : vector<32x256xf32>
    %cst_12 = arith.constant 0.000000e+00 : f32
    %23 = vector.broadcast %cst_12 : f32 to vector<32x256xf32>
    %24 = arith.maximumf %22, %23 : vector<32x256xf32>
    %25 = arith.truncf %24 : vector<32x256xf32> to vector<32x256xbf16>
    %c1 = arith.constant 1 : index
    %c0_13 = arith.constant 0 : index
    %c0_14 = arith.constant 0 : index
    %26 = vector.load %arg4[%c1, %c0_13, %c0_14] : memref<2x128x32xbf16, #tpu.memory_space<vmem>>, vector<1x128x32xbf16>
    %27 = vector.shape_cast %26 : vector<1x128x32xbf16> to vector<128x32xbf16>
    %cst_15 = arith.constant dense<0.000000e+00> : vector<128x256xf32>
    %28 = tpu.matmul %27, %25, %cst_15 {dimension_numbers = #tpu.dot_dimension_numbers<[1], [0], [0], [1], [0, 0, 1, 1], [], []>} : vector<128x32xbf16>, vector<32x256xbf16>, vector<128x256xf32> -> vector<128x256xf32>
    %cst_16 = arith.constant 0.000000e+00 : f32
    %29 = vector.broadcast %cst_16 : f32 to vector<128x256xf32>
    %30 = arith.subf %29, %28 : vector<128x256xf32>
    %31 = math.exp %30 : vector<128x256xf32>
    %cst_17 = arith.constant 1.000000e+00 : f32
    %32 = vector.broadcast %cst_17 : f32 to vector<128x256xf32>
    %33 = arith.addf %32, %31 : vector<128x256xf32>
    %34 = tpu.reciprocal %33 {approx = true} : vector<128x256xf32> -> vector<128x256xf32>
    %35 = arith.addf %19, %34 : vector<128x256xf32>
    %36 = arith.mulf %1, %35 : vector<128x256xf32>
    %cst_18 = arith.constant 5.000000e-01 : f32
    %37 = vector.broadcast %cst_18 : f32 to vector<128x256xf32>
    %38 = arith.mulf %36, %37 : vector<128x256xf32>
    %c0_19 = arith.constant 0 : index
    %c0_20 = arith.constant 0 : index
    %c0_21 = arith.constant 0 : index
    %39 = vector.load %arg5[%c0_19, %c0_20, %c0_21] : memref<1x128x256xf32, #tpu.memory_space<vmem>>, vector<1x128x256xf32>
    %40 = vector.shape_cast %39 : vector<1x128x256xf32> to vector<128x256xf32>
    %41 = vector.shape_cast %38 : vector<128x256xf32> to vector<1x128x256xf32>
    tpu.vector_store %arg5[%c0_19, %c0_20, %c0_21], %41 {strides = array<i32>} : memref<1x128x256xf32, #tpu.memory_space<vmem>>, vector<1x128x256xf32>,
    return
  }
  func.func @transform_0(%arg0: i32, %arg1: i32) -> (i32, i32, i32) {
    %c0_i32 = arith.constant 0 : i32
    %c0_i32_0 = arith.constant 0 : i32
    return %arg0, %c0_i32, %arg1 : i32, i32, i32
  }
  func.func @transform_1(%arg0: i32, %arg1: i32) -> (i32, i32) {
    %c0_i32 = arith.constant 0 : i32
    %c0_i32_0 = arith.constant 0 : i32
    %c0_i32_1 = arith.constant 0 : i32
    return %c0_i32, %c0_i32_0 : i32, i32
  }
  func.func @transform_2(%arg0: i32, %arg1: i32) -> (i32, i32, i32) {
    %c0_i32 = arith.constant 0 : i32
    %c0_i32_0 = arith.constant 0 : i32
    %c0_i32_1 = arith.constant 0 : i32
    %c0_i32_2 = arith.constant 0 : i32
    return %c0_i32, %c0_i32_0, %c0_i32_1 : i32, i32, i32
  }
  func.func @transform_3(%arg0: i32, %arg1: i32) -> (i32, i32, i32) {
    %c0_i32 = arith.constant 0 : i32
    %c0_i32_0 = arith.constant 0 : i32
    return %arg0, %c0_i32, %arg1 : i32, i32, i32
  }
}

</mosaic_0001>

<llo_original>
// kernel: pcb_highdiv_forward.1
$region0: #{pcb_highdiv_forward.1}
  #allocation0 [shape = 'u32[]', space=smem, size = 0x4, offset = 0x4, fixed_abs, tag = 'smem constant byte address 0x4 - core index']
  #allocation1 [shape = 'u32[72,128]{1,0:T(1,128)}', space=vmem, size = 0x9000, scoped, tag = 'internal scratch']
  %s0 = inlined_call_operand.vmem [shape: f32[2,128,256], index: 0, kind: input, shape index: {}]
  %s1 = inlined_call_operand.vmem [shape: bf16[96,128], index: 1, kind: input, shape index: {}]
  %s2 = inlined_call_operand.vmem [shape: bf16[2,128,32], index: 2, kind: input, shape index: {}]
  %s3 = inlined_call_operand.vmem [shape: f32[2,128,256], index: 3, kind: output, shape index: {}]
  %s4 = sld [smem:[#allocation0]]
  $region45: #{pcb_highdiv_forward.1} parent=0
    _
  %s6 = ssub.s32 1, %s4
  %s7 = scalar_select 0, %s6, %s4
  loop: start=0, step=1, limit=4
  $region2: #{pcb_highdiv_forward.1} parent=0 // loop_pre_header
    _
  $region3: #{pcb_highdiv_forward.1} parent=0 // loop_header
    %s9 = sphi 0, %s13
    %p10 = scmp.ge.s32.totalorder %s9, 4
    %s16 = sphi 0, %s28
    %s17 = sphi 0, %s24
    %s18 = sphi 0, %s16
    %s19 = sphi 0, %s17
    %s20 = sphi 0, %s18
    %s21 = sphi 0, %s19
    %s33 = sphi 0, %s35
    %s36 = sphi 0, %s33
    %s37 = sphi 0, %s36
    %s53 = sphi 0, %s37
    %s57 = sphi 0, %s57
    %s59 = sphi 0, %s57
    %s60 = sphi 0, %s59
    %s74 = sphi 0, %s60
    %s78 = sphi 0, %s78
    %s80 = sphi 0, %s78
    %s81 = sphi 0, %s80
    %s95 = sphi 0, %s81
    %s103 = sphi 0, %s105
    %s106 = sphi 0, %s103
    %s107 = sphi 0, %s106
    %s123 = sphi 0, %s107
  $region4: #{pcb_highdiv_forward.1} parent=0 // loop_header_branch
    %12 = sbr.rel (%p10) target = $region8
  $region5: #{pcb_highdiv_forward.1} parent=0 // loop_body
    %s14 = ssub.s32 %s9, 1
    %s15 = ssub.s32 %s9, 2
    %s22 = sadd.s32 1, %s17
    %p23 = scmp.ge.s32.totalorder %s22, 1
    %s24 = scalar_select %p23, 0, %s22
    %s25 = sadd.s32 1, %s16
    %s26 = scalar_select %p23, %s25, %s16
    %p27 = scmp.ge.s32.totalorder %s26, 2
    %s28 = scalar_select %p27, 0, %s26
    %s29 = ssub.s32 %s16, %s28
    %s30 = ssub.s32 %s17, %s24
    %s31 = sor.u32 %s29, %s30
    %p32 = scmp.eq.s32.totalorder %s31, 0
    %s34 = sadd.s32 %s33, 1
    %s35 = scalar_select %p32, %s33, %s34
    %p38 = pneg %p32
    %p39 = scmp.eq.s32.totalorder %s9, 1
    %p40 = por %p38, %p39
    %p41 = scmp.ne.s32.totalorder %s33, %s36
    %p42 = scmp.eq.s32.totalorder %s9, 0
    %p43 = por %p41, %p42
    %p44 = scmp.ne.s32.totalorder %s33, %s36
    %p45 = scmp.eq.s32.totalorder %s14, 1
    %p46 = por %p44, %p45
    %p47 = scmp.ne.s32.totalorder %s36, %s37
    %p48 = scmp.eq.s32.totalorder %s14, 0
    %p49 = por %p47, %p48
    %p50 = scmp.ne.s32.totalorder %s36, %s37
    %p51 = scmp.eq.s32.totalorder %s15, 1
    %p52 = por %p50, %p51
    %p54 = scmp.ne.s32.totalorder %s37, %s53
    %p55 = scmp.eq.s32.totalorder %s15, 0
    %p56 = por %p54, %p55
    %s58 = sadd.s32 %s57, 1
    %p61 = scmp.eq.s32.totalorder %s9, 1
    %p62 = scmp.ne.s32.totalorder %s57, %s59
    %p63 = scmp.eq.s32.totalorder %s9, 0
    %p64 = por %p62, %p63
    %p65 = scmp.ne.s32.totalorder %s57, %s59
    %p66 = scmp.eq.s32.totalorder %s14, 1
    %p67 = por %p65, %p66
    %p68 = scmp.ne.s32.totalorder %s59, %s60
    %p69 = scmp.eq.s32.totalorder %s14, 0
    %p70 = por %p68, %p69
    %p71 = scmp.ne.s32.totalorder %s59, %s60
    %p72 = scmp.eq.s32.totalorder %s15, 1
    %p73 = por %p71, %p72
    %p75 = scmp.ne.s32.totalorder %s60, %s74
    %p76 = scmp.eq.s32.totalorder %s15, 0
    %p77 = por %p75, %p76
    %s79 = sadd.s32 %s78, 1
    %p82 = scmp.eq.s32.totalorder %s9, 1
    %p83 = scmp.ne.s32.totalorder %s78, %s80
    %p84 = scmp.eq.s32.totalorder %s9, 0
    %p85 = por %p83, %p84
    %p86 = scmp.ne.s32.totalorder %s78, %s80
    %p87 = scmp.eq.s32.totalorder %s14, 1
    %p88 = por %p86, %p87
    %p89 = scmp.ne.s32.totalorder %s80, %s81
    %p90 = scmp.eq.s32.totalorder %s14, 0
    %p91 = por %p89, %p90
    %p92 = scmp.ne.s32.totalorder %s80, %s81
    %p93 = scmp.eq.s32.totalorder %s15, 1
    %p94 = por %p92, %p93
    %p96 = scmp.ne.s32.totalorder %s81, %s95
    %p97 = scmp.eq.s32.totalorder %s15, 0
    %p98 = por %p96, %p97
    %s99 = ssub.s32 %s16, %s28
    %s100 = ssub.s32 %s17, %s24
    %s101 = sor.u32 %s99, %s100
    %p102 = scmp.eq.s32.totalorder %s101, 0
    %s104 = sadd.s32 %s103, 1
    %s105 = scalar_select %p102, %s103, %s104
    %p108 = pneg %p102
    %p109 = scmp.eq.s32.totalorder %s9, 1
    %p110 = por %p108, %p109
    %p111 = scmp.ne.s32.totalorder %s103, %s106
    %p112 = scmp.eq.s32.totalorder %s9, 0
    %p113 = por %p111, %p112
    %p114 = scmp.ne.s32.totalorder %s103, %s106
    %p115 = scmp.eq.s32.totalorder %s14, 1
    %p116 = por %p114, %p115
    %p117 = scmp.ne.s32.totalorder %s106, %s107
    %p118 = scmp.eq.s32.totalorder %s14, 0
    %p119 = por %p117, %p118
    %p120 = scmp.ne.s32.totalorder %s106, %s107
    %p121 = scmp.eq.s32.totalorder %s15, 1
    %p122 = por %p120, %p121
    %p124 = scmp.ne.s32.totalorder %s107, %s123
    %p125 = scmp.eq.s32.totalorder %s15, 0
    %p126 = por %p124, %p125
    %p127 = scmp.le.s32.totalorder 1, %s9
    %p128 = scmp.lt.s32.totalorder %s9, 3
    %p129 = pnand %p127, %p128
    %p130 = pneg %p129
    // Predicated region
    $region9: #{pcb_highdiv_forward.1} parent=5 // pred_check
      _
    $region10: #{pcb_highdiv_forward.1} parent=5 // pred_check_branch
      %132 = sbr.rel (%p129) target = $region12
    $region11: #{pcb_highdiv_forward.1} parent=5 // pred_region
      %s133 = ssub.s32 %s9, 1
      // Predicated region
      $region13: #{pcb_highdiv_forward.1} parent=11 // pred_check
        %p134 = pneg %p70
      $region14: #{pcb_highdiv_forward.1} parent=11 // pred_check_branch
        %136 = sbr.rel (%p134) target = $region16
      $region15: #{pcb_highdiv_forward.1} parent=11 // pred_region
        _
      $region16: #{pcb_highdiv_forward.1} parent=11 // pred_fallthru
        _
      // Predicated region
      $region17: #{pcb_highdiv_forward.1} parent=11 // pred_check
        %p137 = pneg %p91
      $region18: #{pcb_highdiv_forward.1} parent=11 // pred_check_branch
        %139 = sbr.rel (%p137) target = $region20
      $region19: #{pcb_highdiv_forward.1} parent=11 // pred_region
        _
      $region20: #{pcb_highdiv_forward.1} parent=11 // pred_fallthru
        _
    $region12: #{pcb_highdiv_forward.1} parent=5 // pred_fallthru
      _
    %p140 = scmp.lt.s32.totalorder %s9, 2
    // Predicated region
    $region21: #{pcb_highdiv_forward.1} parent=5 // pred_check
      %p141 = pneg %p140
    $region22: #{pcb_highdiv_forward.1} parent=5 // pred_check_branch
      %143 = sbr.rel (%p141) target = $region24
    $region23: #{pcb_highdiv_forward.1} parent=5 // pred_region
      // Predicated region
      $region25: #{pcb_highdiv_forward.1} parent=23 // pred_check
        %p144 = pneg %p43
      $region26: #{pcb_highdiv_forward.1} parent=23 // pred_check_branch
        %146 = sbr.rel (%p144) target = $region28
      $region27: #{pcb_highdiv_forward.1} parent=23 // pred_region
        %s147 = smul.u32 2, %s17
        %p148 = scmp.lt.s32.totalorder %s16, 1
        %s149 = scalar_select %p148, %s16, 1
        %p150 = scmp.lt.s32.totalorder %s147, 1
        %s151 = scalar_select %p150, %s147, 1
        %s152 = smul.addr %s149, 32
        %s153 = sadd.s32 %s151, %s152
        %s154 = smul.addr %s153, 8
        %s155 = scalar_lea.vmem %s0, %s154
        %s156 = smul.u32 2, %s17
      $region28: #{pcb_highdiv_forward.1} parent=23 // pred_fallthru
        _
    $region24: #{pcb_highdiv_forward.1} parent=5 // pred_fallthru
      _
    %p157 = scmp.le.s32.totalorder 1, %s9
    %p158 = scmp.lt.s32.totalorder %s9, 3
    %p159 = pnand %p157, %p158
    %p160 = pneg %p159
    // Predicated region
    $region29: #{pcb_highdiv_forward.1} parent=5 // pred_check
      _
    $region30: #{pcb_highdiv_forward.1} parent=5 // pred_check_branch
      %162 = sbr.rel (%p159) target = $region32
    $region31: #{pcb_highdiv_forward.1} parent=5 // pred_region
      %s163 = ssub.s32 %s9, 1
      %s164 = smul.u32 2, %s19
      %p165 = scmp.lt.s32.totalorder %s18, 1
      %s166 = scalar_select %p165, %s18, 1
      %p167 = scmp.lt.s32.totalorder %s164, 1
      %s168 = scalar_select %p167, %s164, 1
      %s169 = smul.addr %s166, 32
      %s170 = sadd.s32 %s168, %s169
      %s171 = smul.addr %s170, 8
      %s172 = scalar_lea.vmem %s0, %s171
      %p173 = pneg %p49
      %p174 = pneg %p46
      %p175 = pneg %p70
      %p176 = pneg %p67
      %p177 = pneg %p91
      %p178 = pneg %p88
      %p179 = pneg %p119
      %p180 = pneg %p116
      %s181 = smul.u32 2, %s19
      %p182 = scmp.lt.s32.totalorder %s18, 1
      %s183 = scalar_select %p182, %s18, 1
      %p184 = scmp.lt.s32.totalorder %s181, 1
      %s185 = scalar_select %p184, %s181, 1
      %s186 = smul.addr %s183, 32
      %s187 = sadd.s32 %s185, %s186
      %s188 = smul.addr %s187, 8
      %s189 = scalar_lea.vmem %s3, %s188
      %s190 = smul.u32 2, %s19
      %p191 = scmp.lt.s32.totalorder %s18, 1
      %s192 = scalar_select %p191, %s18, 1
      %p193 = scmp.lt.s32.totalorder %s190, 1
      %s194 = scalar_select %p193, %s190, 1
      %s195 = smul.addr %s192, 32
      %s196 = sadd.s32 %s194, %s195
      %s197 = smul.addr %s196, 8
      %s198 = scalar_lea.vmem %s0, %s197
      %s199 = smul.u32 2, %s19
      %s200 = smul.u32 2, %s19
      %p201 = scmp.lt.s32.totalorder %s18, 1
      %s202 = scalar_select %p201, %s18, 1
      %p203 = scmp.lt.s32.totalorder %s200, 1
      %s204 = scalar_select %p203, %s200, 1
      %s205 = smul.addr %s202, 32
      %s206 = sadd.s32 %s204, %s205
      %s207 = smul.addr %s206, 8
      %s208 = scalar_lea.vmem %s3, %s207
      %s209 = smul.u32 2, %s19
      %v211 = vld [vmem:[%s198] sm:$0xff]
      %v212 = vld [vmem:[%s198 + $0x8] sm:$0xff]
      %v213 = vld [vmem:[%s198 + $0x10] sm:$0xff]
      %v214 = vld [vmem:[%s198 + $0x18] sm:$0xff]
      %v215 = vld [vmem:[%s198 + $0x20] sm:$0xff]
      %v216 = vld [vmem:[%s198 + $0x28] sm:$0xff]
      %v217 = vld [vmem:[%s198 + $0x30] sm:$0xff]
      %v218 = vld [vmem:[%s198 + $0x38] sm:$0xff]
      %v219 = vld [vmem:[%s198 + $0x40] sm:$0xff]
      %v220 = vld [vmem:[%s198 + $0x48] sm:$0xff]
      %v221 = vld [vmem:[%s198 + $0x50] sm:$0xff]
      %v222 = vld [vmem:[%s198 + $0x58] sm:$0xff]
      %v223 = vld [vmem:[%s198 + $0x60] sm:$0xff]
      %v224 = vld [vmem:[%s198 + $0x68] sm:$0xff]
      %v225 = vld [vmem:[%s198 + $0x70] sm:$0xff]
      %v226 = vld [vmem:[%s198 + $0x78] sm:$0xff]
      %v227 = vld [vmem:[%s198 + $0x80] sm:$0xff]
      %v228 = vld [vmem:[%s198 + $0x88] sm:$0xff]
      %v229 = vld [vmem:[%s198 + $0x90] sm:$0xff]
      %v230 = vld [vmem:[%s198 + $0x98] sm:$0xff]
      %v231 = vld [vmem:[%s198 + $0xa0] sm:$0xff]
      %v232 = vld [vmem:[%s198 + $0xa8] sm:$0xff]
      %v233 = vld [vmem:[%s198 + $0xb0] sm:$0xff]
      %v234 = vld [vmem:[%s198 + $0xb8] sm:$0xff]
      %v235 = vld [vmem:[%s198 + $0xc0] sm:$0xff]
      %v236 = vld [vmem:[%s198 + $0xc8] sm:$0xff]
      %v237 = vld [vmem:[%s198 + $0xd0] sm:$0xff]
      %v238 = vld [vmem:[%s198 + $0xd8] sm:$0xff]
      %v239 = vld [vmem:[%s198 + $0xe0] sm:$0xff]
      %v240 = vld [vmem:[%s198 + $0xe8] sm:$0xff]
      %v241 = vld [vmem:[%s198 + $0xf0] sm:$0xff]
      %v242 = vld [vmem:[%s198 + $0xf8] sm:$0xff]
      %v243 = vpack.c.bf16 %v213, %v211
      %v244 = vpack.c.bf16 %v214, %v212
      %v245 = vpack.c.bf16 %v217, %v215
      %v246 = vpack.c.bf16 %v218, %v216
      %v247 = vpack.c.bf16 %v221, %v219
      %v248 = vpack.c.bf16 %v222, %v220
      %v249 = vpack.c.bf16 %v225, %v223
      %v250 = vpack.c.bf16 %v226, %v224
      %v251 = vpack.c.bf16 %v229, %v227
      %v252 = vpack.c.bf16 %v230, %v228
      %v253 = vpack.c.bf16 %v233, %v231
      %v254 = vpack.c.bf16 %v234, %v232
      %v255 = vpack.c.bf16 %v237, %v235
      %v256 = vpack.c.bf16 %v238, %v236
      %v257 = vpack.c.bf16 %v241, %v239
      %v258 = vpack.c.bf16 %v242, %v240
      %v259 = vld [vmem:[%s1] sm:$0xf]
      %v260 = vld [vmem:[%s1 + $0x4] sm:$0xf]
      %v261 = vld [vmem:[%s1 + $0x8] sm:$0xf]
      %v262 = vld [vmem:[%s1 + $0xc] sm:$0xf]
      %v263 = vld [vmem:[%s1 + $0x10] sm:$0xf]
      %v264 = vld [vmem:[%s1 + $0x14] sm:$0xf]
      %v265 = vld [vmem:[%s1 + $0x18] sm:$0xf]
      %v266 = vld [vmem:[%s1 + $0x1c] sm:$0xf]
      %v267 = vld [vmem:[%s1 + $0x20] sm:$0xf]
      %v268 = vld [vmem:[%s1 + $0x24] sm:$0xf]
      %v269 = vld [vmem:[%s1 + $0x28] sm:$0xf]
      %v270 = vld [vmem:[%s1 + $0x2c] sm:$0xf]
      %v283 = vunpack.c.l.b16 %v259
      %v284 = vunpack.c.l.b16 %v260
      %v285 = vunpack.c.l.b16 %v261
      %v286 = vunpack.c.l.b16 %v262
      %v287 = vunpack.c.l.b16 %v263
      %v288 = vunpack.c.l.b16 %v264
      %v289 = vunpack.c.l.b16 %v265
      %v290 = vunpack.c.l.b16 %v266
      %v291 = vunpack.c.l.b16 %v267
      %v292 = vunpack.c.l.b16 %v268
      %v293 = vunpack.c.l.b16 %v269
      %v294 = vunpack.c.l.b16 %v270
      %v295 = vpack.c.b16 %v284, %v283
      %v296 = vpack.c.b16 %v286, %v285
      %v297 = vpack.c.b16 %v288, %v287
      %v298 = vpack.c.b16 %v290, %v289
      %v299 = vpack.c.b16 %v292, %v291
      %v300 = vpack.c.b16 %v294, %v293
      %307 = vmatpush.bf16.msra.mxu0 %v257
      %308 = vmatpush.bf16.msra.mxu0 %v255
      %309 = vmatpush.bf16.msra.mxu0 %v253
      %310 = vmatpush.bf16.msra.mxu0 %v251
      %311 = vmatpush.bf16.msra.mxu0 %v249
      %312 = vmatpush.bf16.msra.mxu0 %v247
      %313 = vmatpush.bf16.msra.mxu0 %v245
      %314 = vmatpush.bf16.msra.mxu0 %v243
      %315 = vmatmul.bf16.gmra.mxu0 %v295
      %v316 = vpop.f32.mrf.mxu0
      %v317 = vadd.f32 0.0, %v316
      %v318 = vpop.f32.mrf.mxu0
      %v319 = vadd.f32 0.0, %v318
      %320 = vmatmul.bf16.gmra.mxu0 %v296
      %v321 = vpop.f32.mrf.mxu0
      %v322 = vadd.f32 0.0, %v321
      %v323 = vpop.f32.mrf.mxu0
      %v324 = vadd.f32 0.0, %v323
      %325 = vmatmul.bf16.gmra.mxu0 %v297
      %v326 = vpop.f32.mrf.mxu0
      %v327 = vadd.f32 0.0, %v326
      %v328 = vpop.f32.mrf.mxu0
      %v329 = vadd.f32 0.0, %v328
      %330 = vmatmul.bf16.gmra.mxu0 %v298
      %v331 = vpop.f32.mrf.mxu0
      %v332 = vadd.f32 0.0, %v331
      %v333 = vpop.f32.mrf.mxu0
      %v334 = vadd.f32 0.0, %v333
      %335 = vmatmul.bf16.gmra.mxu0 %v299
      %v336 = vpop.f32.mrf.mxu0
      %v337 = vadd.f32 0.0, %v336
      %v338 = vpop.f32.mrf.mxu0
      %v339 = vadd.f32 0.0, %v338
      %340 = vmatmul.bf16.gmra.mxu0 %v300
      %v341 = vpop.f32.mrf.mxu0
      %v342 = vadd.f32 0.0, %v341
      %v343 = vpop.f32.mrf.mxu0
      %v344 = vadd.f32 0.0, %v343
      %345 = vdwg.mxu0
      %346 = vmatpush.bf16.msra.mxu0 %v258
      %347 = vmatpush.bf16.msra.mxu0 %v256
      %348 = vmatpush.bf16.msra.mxu0 %v254
      %349 = vmatpush.bf16.msra.mxu0 %v252
      %350 = vmatpush.bf16.msra.mxu0 %v250
      %351 = vmatpush.bf16.msra.mxu0 %v248
      %352 = vmatpush.bf16.msra.mxu0 %v246
      %353 = vmatpush.bf16.msra.mxu0 %v244
      %354 = vmatmul.bf16.gmra.mxu0 %v295
      %v355 = vpop.f32.mrf.mxu0
      %v356 = vadd.f32 0.0, %v355
      %v357 = vpop.f32.mrf.mxu0
      %v358 = vadd.f32 0.0, %v357
      %359 = vmatmul.bf16.gmra.mxu0 %v296
      %v360 = vpop.f32.mrf.mxu0
      %v361 = vadd.f32 0.0, %v360
      %v362 = vpop.f32.mrf.mxu0
      %v363 = vadd.f32 0.0, %v362
      %364 = vmatmul.bf16.gmra.mxu0 %v297
      %v365 = vpop.f32.mrf.mxu0
      %v366 = vadd.f32 0.0, %v365
      %v367 = vpop.f32.mrf.mxu0
      %v368 = vadd.f32 0.0, %v367
      %369 = vmatmul.bf16.gmra.mxu0 %v298
      %v370 = vpop.f32.mrf.mxu0
      %v371 = vadd.f32 0.0, %v370
      %v372 = vpop.f32.mrf.mxu0
      %v373 = vadd.f32 0.0, %v372
      %374 = vmatmul.bf16.gmra.mxu0 %v299
      %v375 = vpop.f32.mrf.mxu0
      %v376 = vadd.f32 0.0, %v375
      %v377 = vpop.f32.mrf.mxu0
      %v378 = vadd.f32 0.0, %v377
      %379 = vmatmul.bf16.gmra.mxu0 %v300
      %v380 = vpop.f32.mrf.mxu0
      %v381 = vadd.f32 0.0, %v380
      %v382 = vpop.f32.mrf.mxu0
      %v383 = vadd.f32 0.0, %v382
      %384 = vdwg.mxu0
      %v385 = vmax.f32 %v317, 0.0
      %v386 = vmax.f32 %v356, 0.0
      %v387 = vmax.f32 %v319, 0.0
      %v388 = vmax.f32 %v358, 0.0
      %v389 = vmax.f32 %v322, 0.0
      %v390 = vmax.f32 %v361, 0.0
      %v391 = vmax.f32 %v324, 0.0
      %v392 = vmax.f32 %v363, 0.0
      %v393 = vpack.c.bf16 %v387, %v385
      %v394 = vpack.c.bf16 %v388, %v386
      %v395 = vpack.c.bf16 %v391, %v389
      %v396 = vpack.c.bf16 %v392, %v390
      %v397 = vld [vmem:[%s2] sm:$0xf]
      %v398 = vld [vmem:[%s2 + $0x4] sm:$0xf]
      %v399 = vld [vmem:[%s2 + $0x8] sm:$0xf]
      %v400 = vld [vmem:[%s2 + $0xc] sm:$0xf]
      %v401 = vld [vmem:[%s2 + $0x10] sm:$0xf]
      %v402 = vld [vmem:[%s2 + $0x14] sm:$0xf]
      %v403 = vld [vmem:[%s2 + $0x18] sm:$0xf]
      %v404 = vld [vmem:[%s2 + $0x1c] sm:$0xf]
      %v405 = vld [vmem:[%s2 + $0x20] sm:$0xf]
      %v406 = vld [vmem:[%s2 + $0x24] sm:$0xf]
      %v407 = vld [vmem:[%s2 + $0x28] sm:$0xf]
      %v408 = vld [vmem:[%s2 + $0x2c] sm:$0xf]
      %v409 = vld [vmem:[%s2 + $0x30] sm:$0xf]
      %v410 = vld [vmem:[%s2 + $0x34] sm:$0xf]
      %v411 = vld [vmem:[%s2 + $0x38] sm:$0xf]
      %v412 = vld [vmem:[%s2 + $0x3c] sm:$0xf]
      %v429 = vunpack.c.l.b16 %v397
      %v430 = vunpack.c.l.b16 %v398
      %v431 = vunpack.c.l.b16 %v399
      %v432 = vunpack.c.l.b16 %v400
      %v433 = vunpack.c.l.b16 %v401
      %v434 = vunpack.c.l.b16 %v402
      %v435 = vunpack.c.l.b16 %v403
      %v436 = vunpack.c.l.b16 %v404
      %v437 = vunpack.c.l.b16 %v405
      %v438 = vunpack.c.l.b16 %v406
      %v439 = vunpack.c.l.b16 %v407
      %v440 = vunpack.c.l.b16 %v408
      %v441 = vunpack.c.l.b16 %v409
      %v442 = vunpack.c.l.b16 %v410
      %v443 = vunpack.c.l.b16 %v411
      %v444 = vunpack.c.l.b16 %v412
      %v445 = vpack.c.b16 %v430, %v429
      %v446 = vpack.c.b16 %v432, %v431
      %v447 = vpack.c.b16 %v434, %v433
      %v448 = vpack.c.b16 %v436, %v435
      %v449 = vpack.c.b16 %v438, %v437
      %v450 = vpack.c.b16 %v440, %v439
      %v451 = vpack.c.b16 %v442, %v441
      %v452 = vpack.c.b16 %v444, %v443
      %vm453 = vcmask 261120
      %v455 = vsel %vm453, %v445, 0
      %v458 = vsel %vm453, %v446, 0
      %v461 = vsel %vm453, %v447, 0
      %v464 = vsel %vm453, %v448, 0
      %v467 = vsel %vm453, %v449, 0
      %v470 = vsel %vm453, %v450, 0
      %v473 = vsel %vm453, %v451, 0
      %v476 = vsel %vm453, %v452, 0
      %478 = vmatpush.bf16.msra.mxu0 0
      %479 = vmatpush.bf16.msra.mxu0 0
      %480 = vmatpush.bf16.msra.mxu0 0
      %481 = vmatpush.bf16.msra.mxu0 0
      %482 = vmatpush.bf16.msra.mxu0 0
      %483 = vmatpush.bf16.msra.mxu0 0
      %484 = vmatpush.bf16.msra.mxu0 %v395
      %485 = vmatpush.bf16.msra.mxu0 %v393
      %486 = vmatmul.bf16.gmra.mxu0 %v455
      %v487 = vpop.f32.mrf.mxu0
      %v488 = vadd.f32 0.0, %v487
      %v489 = vpop.f32.mrf.mxu0
      %v490 = vadd.f32 0.0, %v489
      %491 = vmatmul.bf16.gmra.mxu0 %v458
      %v492 = vpop.f32.mrf.mxu0
      %v493 = vadd.f32 0.0, %v492
      %v494 = vpop.f32.mrf.mxu0
      %v495 = vadd.f32 0.0, %v494
      %496 = vmatmul.bf16.gmra.mxu0 %v461
      %v497 = vpop.f32.mrf.mxu0
      %v498 = vadd.f32 0.0, %v497
      %v499 = vpop.f32.mrf.mxu0
      %v500 = vadd.f32 0.0, %v499
      %501 = vmatmul.bf16.gmra.mxu0 %v464
      %v502 = vpop.f32.mrf.mxu0
      %v503 = vadd.f32 0.0, %v502
      %v504 = vpop.f32.mrf.mxu0
      %v505 = vadd.f32 0.0, %v504
      %506 = vmatmul.bf16.gmra.mxu0 %v467
      %v507 = vpop.f32.mrf.mxu0
      %v508 = vadd.f32 0.0, %v507
      %v509 = vpop.f32.mrf.mxu0
      %v510 = vadd.f32 0.0, %v509
      %511 = vmatmul.bf16.gmra.mxu0 %v470
      %v512 = vpop.f32.mrf.mxu0
      %v513 = vadd.f32 0.0, %v512
      %v514 = vpop.f32.mrf.mxu0
      %v515 = vadd.f32 0.0, %v514
      %516 = vmatmul.bf16.gmra.mxu0 %v473
      %v517 = vpop.f32.mrf.mxu0
      %v518 = vadd.f32 0.0, %v517
      %v519 = vpop.f32.mrf.mxu0
      %v520 = vadd.f32 0.0, %v519
      %521 = vmatmul.bf16.gmra.mxu0 %v476
      %v522 = vpop.f32.mrf.mxu0
      %v523 = vadd.f32 0.0, %v522
      %v524 = vpop.f32.mrf.mxu0
      %v525 = vadd.f32 0.0, %v524
      %526 = vdwg.mxu0
      %527 = vmatpush.bf16.msra.mxu0 0
      %528 = vmatpush.bf16.msra.mxu0 0
      %529 = vmatpush.bf16.msra.mxu0 0
      %530 = vmatpush.bf16.msra.mxu0 0
      %531 = vmatpush.bf16.msra.mxu0 0
      %532 = vmatpush.bf16.msra.mxu0 0
      %533 = vmatpush.bf16.msra.mxu0 %v396
      %534 = vmatpush.bf16.msra.mxu0 %v394
      %535 = vmatmul.bf16.gmra.mxu0 %v455
      %v536 = vpop.f32.mrf.mxu0
      %v537 = vadd.f32 0.0, %v536
      %v538 = vpop.f32.mrf.mxu0
      %v539 = vadd.f32 0.0, %v538
      %540 = vmatmul.bf16.gmra.mxu0 %v458
      %v541 = vpop.f32.mrf.mxu0
      %v542 = vadd.f32 0.0, %v541
      %v543 = vpop.f32.mrf.mxu0
      %v544 = vadd.f32 0.0, %v543
      %545 = vmatmul.bf16.gmra.mxu0 %v461
      %v546 = vpop.f32.mrf.mxu0
      %v547 = vadd.f32 0.0, %v546
      %v548 = vpop.f32.mrf.mxu0
      %v549 = vadd.f32 0.0, %v548
      %550 = vmatmul.bf16.gmra.mxu0 %v464
      %v551 = vpop.f32.mrf.mxu0
      %v552 = vadd.f32 0.0, %v551
      %v553 = vpop.f32.mrf.mxu0
      %v554 = vadd.f32 0.0, %v553
      %555 = vmatmul.bf16.gmra.mxu0 %v467
      %v556 = vpop.f32.mrf.mxu0
      %v557 = vadd.f32 0.0, %v556
      %v558 = vpop.f32.mrf.mxu0
      %v559 = vadd.f32 0.0, %v558
      %560 = vmatmul.bf16.gmra.mxu0 %v470
      %v561 = vpop.f32.mrf.mxu0
      %v562 = vadd.f32 0.0, %v561
      %v563 = vpop.f32.mrf.mxu0
      %v564 = vadd.f32 0.0, %v563
      %565 = vmatmul.bf16.gmra.mxu0 %v473
      %v566 = vpop.f32.mrf.mxu0
      %v567 = vadd.f32 0.0, %v566
      %v568 = vpop.f32.mrf.mxu0
      %v569 = vadd.f32 0.0, %v568
      %570 = vmatmul.bf16.gmra.mxu0 %v476
      %v571 = vpop.f32.mrf.mxu0
      %v572 = vadd.f32 0.0, %v571
      %v573 = vpop.f32.mrf.mxu0
      %v574 = vadd.f32 0.0, %v573
      %575 = vdwg.mxu0
      %v576 = vsub.f32 0.0, %v488
      %v577 = vsub.f32 0.0, %v537
      %v578 = vsub.f32 0.0, %v490
      %v579 = vsub.f32 0.0, %v539
      %v580 = vsub.f32 0.0, %v493
      %v581 = vsub.f32 0.0, %v542
      %v582 = vsub.f32 0.0, %v495
      %v583 = vsub.f32 0.0, %v544
      %v584 = vsub.f32 0.0, %v498
      %v585 = vsub.f32 0.0, %v547
      %v586 = vsub.f32 0.0, %v500
      %v587 = vsub.f32 0.0, %v549
      %v588 = vsub.f32 0.0, %v503
      %v589 = vsub.f32 0.0, %v552
      %v590 = vsub.f32 0.0, %v505
      %v591 = vsub.f32 0.0, %v554
      %v592 = vsub.f32 0.0, %v508
      %v593 = vsub.f32 0.0, %v557
      %v594 = vsub.f32 0.0, %v510
      %v595 = vsub.f32 0.0, %v559
      %v596 = vsub.f32 0.0, %v513
      %v597 = vsub.f32 0.0, %v562
      %v598 = vsub.f32 0.0, %v515
      %v599 = vsub.f32 0.0, %v564
      %v600 = vsub.f32 0.0, %v518
      %v601 = vsub.f32 0.0, %v567
      %v602 = vsub.f32 0.0, %v520
      %v603 = vsub.f32 0.0, %v569
      %v604 = vsub.f32 0.0, %v523
      %v605 = vsub.f32 0.0, %v572
      %v606 = vsub.f32 0.0, %v525
      %v607 = vsub.f32 0.0, %v574
      %v608 = vmul.f32 %v576, 1.442695
      %v609 = vpow.pop %v608
      %v610 = vmul.f32 %v577, 1.442695
      %v611 = vpow.pop %v610
      %v612 = vmul.f32 %v578, 1.442695
      %v613 = vpow.pop %v612
      %v614 = vmul.f32 %v579, 1.442695
      %v615 = vpow.pop %v614
      %v616 = vmul.f32 %v580, 1.442695
      %v617 = vpow.pop %v616
      %v618 = vmul.f32 %v581, 1.442695
      %v619 = vpow.pop %v618
      %v620 = vmul.f32 %v582, 1.442695
      %v621 = vpow.pop %v620
      %v622 = vmul.f32 %v583, 1.442695
      %v623 = vpow.pop %v622
      %v624 = vmul.f32 %v584, 1.442695
      %v625 = vpow.pop %v624
      %v626 = vmul.f32 %v585, 1.442695
      %v627 = vpow.pop %v626
      %v628 = vmul.f32 %v586, 1.442695
      %v629 = vpow.pop %v628
      %v630 = vmul.f32 %v587, 1.442695
      %v631 = vpow.pop %v630
      %v632 = vmul.f32 %v588, 1.442695
      %v633 = vpow.pop %v632
      %v634 = vmul.f32 %v589, 1.442695
      %v635 = vpow.pop %v634
      %v636 = vmul.f32 %v590, 1.442695
      %v637 = vpow.pop %v636
      %v638 = vmul.f32 %v591, 1.442695
      %v639 = vpow.pop %v638
      %v640 = vmul.f32 %v592, 1.442695
      %v641 = vpow.pop %v640
      %v642 = vmul.f32 %v593, 1.442695
      %v643 = vpow.pop %v642
      %v644 = vmul.f32 %v594, 1.442695
      %v645 = vpow.pop %v644
      %v646 = vmul.f32 %v595, 1.442695
      %v647 = vpow.pop %v646
      %v648 = vmul.f32 %v596, 1.442695
      %v649 = vpow.pop %v648
      %v650 = vmul.f32 %v597, 1.442695
      %v651 = vpow.pop %v650
      %v652 = vmul.f32 %v598, 1.442695
      %v653 = vpow.pop %v652
      %v654 = vmul.f32 %v599, 1.442695
      %v655 = vpow.pop %v654
      %v656 = vmul.f32 %v600, 1.442695
      %v657 = vpow.pop %v656
      %v658 = vmul.f32 %v601, 1.442695
      %v659 = vpow.pop %v658
      %v660 = vmul.f32 %v602, 1.442695
      %v661 = vpow.pop %v660
      %v662 = vmul.f32 %v603, 1.442695
      %v663 = vpow.pop %v662
      %v664 = vmul.f32 %v604, 1.442695
      %v665 = vpow.pop %v664
      %v666 = vmul.f32 %v605, 1.442695
      %v667 = vpow.pop %v666
      %v668 = vmul.f32 %v606, 1.442695
      %v669 = vpow.pop %v668
      %v670 = vmul.f32 %v607, 1.442695
      %v671 = vpow.pop %v670
      %v672 = vadd.f32 %v609, 1.0
      %v673 = vadd.f32 %v611, 1.0
      %v674 = vadd.f32 %v613, 1.0
      %v675 = vadd.f32 %v615, 1.0
      %v676 = vadd.f32 %v617, 1.0
      %v677 = vadd.f32 %v619, 1.0
      %v678 = vadd.f32 %v621, 1.0
      %v679 = vadd.f32 %v623, 1.0
      %v680 = vadd.f32 %v625, 1.0
      %v681 = vadd.f32 %v627, 1.0
      %v682 = vadd.f32 %v629, 1.0
      %v683 = vadd.f32 %v631, 1.0
      %v684 = vadd.f32 %v633, 1.0
      %v685 = vadd.f32 %v635, 1.0
      %v686 = vadd.f32 %v637, 1.0
      %v687 = vadd.f32 %v639, 1.0
      %v688 = vadd.f32 %v641, 1.0
      %v689 = vadd.f32 %v643, 1.0
      %v690 = vadd.f32 %v645, 1.0
      %v691 = vadd.f32 %v647, 1.0
      %v692 = vadd.f32 %v649, 1.0
      %v693 = vadd.f32 %v651, 1.0
      %v694 = vadd.f32 %v653, 1.0
      %v695 = vadd.f32 %v655, 1.0
      %v696 = vadd.f32 %v657, 1.0
      %v697 = vadd.f32 %v659, 1.0
      %v698 = vadd.f32 %v661, 1.0
      %v699 = vadd.f32 %v663, 1.0
      %v700 = vadd.f32 %v665, 1.0
      %v701 = vadd.f32 %v667, 1.0
      %v702 = vadd.f32 %v669, 1.0
      %v703 = vadd.f32 %v671, 1.0
      %v704 = vrcp.pop %v672
      %v705 = vrcp.pop %v673
      %v706 = vrcp.pop %v674
      %v707 = vrcp.pop %v675
      %v708 = vrcp.pop %v676
      %v709 = vrcp.pop %v677
      %v710 = vrcp.pop %v678
      %v711 = vrcp.pop %v679
      %v712 = vrcp.pop %v680
      %v713 = vrcp.pop %v681
      %v714 = vrcp.pop %v682
      %v715 = vrcp.pop %v683
      %v716 = vrcp.pop %v684
      %v717 = vrcp.pop %v685
      %v718 = vrcp.pop %v686
      %v719 = vrcp.pop %v687
      %v720 = vrcp.pop %v688
      %v721 = vrcp.pop %v689
      %v722 = vrcp.pop %v690
      %v723 = vrcp.pop %v691
      %v724 = vrcp.pop %v692
      %v725 = vrcp.pop %v693
      %v726 = vrcp.pop %v694
      %v727 = vrcp.pop %v695
      %v728 = vrcp.pop %v696
      %v729 = vrcp.pop %v697
      %v730 = vrcp.pop %v698
      %v731 = vrcp.pop %v699
      %v732 = vrcp.pop %v700
      %v733 = vrcp.pop %v701
      %v734 = vrcp.pop %v702
      %v735 = vrcp.pop %v703
      %v736 = vadd.f32 %v704, 0.0
      %v737 = vadd.f32 %v705, 0.0
      %v738 = vadd.f32 %v706, 0.0
      %v739 = vadd.f32 %v707, 0.0
      %v740 = vadd.f32 %v708, 0.0
      %v741 = vadd.f32 %v709, 0.0
      %v742 = vadd.f32 %v710, 0.0
      %v743 = vadd.f32 %v711, 0.0
      %v744 = vadd.f32 %v712, 0.0
      %v745 = vadd.f32 %v713, 0.0
      %v746 = vadd.f32 %v714, 0.0
      %v747 = vadd.f32 %v715, 0.0
      %v748 = vadd.f32 %v716, 0.0
      %v749 = vadd.f32 %v717, 0.0
      %v750 = vadd.f32 %v718, 0.0
      %v751 = vadd.f32 %v719, 0.0
      %v752 = vadd.f32 %v720, 0.0
      %v753 = vadd.f32 %v721, 0.0
      %v754 = vadd.f32 %v722, 0.0
      %v755 = vadd.f32 %v723, 0.0
      %v756 = vadd.f32 %v724, 0.0
      %v757 = vadd.f32 %v725, 0.0
      %v758 = vadd.f32 %v726, 0.0
      %v759 = vadd.f32 %v727, 0.0
      %v760 = vadd.f32 %v728, 0.0
      %v761 = vadd.f32 %v729, 0.0
      %v762 = vadd.f32 %v730, 0.0
      %v763 = vadd.f32 %v731, 0.0
      %v764 = vadd.f32 %v732, 0.0
      %v765 = vadd.f32 %v733, 0.0
      %v766 = vadd.f32 %v734, 0.0
      %v767 = vadd.f32 %v735, 0.0
      %v768 = vmul.f32 %v327, %v337
      %v769 = vmul.f32 %v366, %v376
      %v770 = vmul.f32 %v329, %v339
      %v771 = vmul.f32 %v368, %v378
      %v772 = vmul.f32 %v332, %v342
      %v773 = vmul.f32 %v371, %v381
      %v774 = vmul.f32 %v334, %v344
      %v775 = vmul.f32 %v373, %v383
      %v776 = vmax.f32 %v768, 0.0
      %v777 = vmax.f32 %v769, 0.0
      %v778 = vmax.f32 %v770, 0.0
      %v779 = vmax.f32 %v771, 0.0
      %v780 = vmax.f32 %v772, 0.0
      %v781 = vmax.f32 %v773, 0.0
      %v782 = vmax.f32 %v774, 0.0
      %v783 = vmax.f32 %v775, 0.0
      %v784 = vpack.c.bf16 %v778, %v776
      %v785 = vpack.c.bf16 %v779, %v777
      %v786 = vpack.c.bf16 %v782, %v780
      %v787 = vpack.c.bf16 %v783, %v781
      %s788 = scalar_lea.vmem %s2, 64
      %v789 = vld [vmem:[%s788] sm:$0xf]
      %v790 = vld [vmem:[%s788 + $0x4] sm:$0xf]
      %v791 = vld [vmem:[%s788 + $0x8] sm:$0xf]
      %v792 = vld [vmem:[%s788 + $0xc] sm:$0xf]
      %v793 = vld [vmem:[%s788 + $0x10] sm:$0xf]
      %v794 = vld [vmem:[%s788 + $0x14] sm:$0xf]
      %v795 = vld [vmem:[%s788 + $0x18] sm:$0xf]
      %v796 = vld [vmem:[%s788 + $0x1c] sm:$0xf]
      %v797 = vld [vmem:[%s788 + $0x20] sm:$0xf]
      %v798 = vld [vmem:[%s788 + $0x24] sm:$0xf]
      %v799 = vld [vmem:[%s788 + $0x28] sm:$0xf]
      %v800 = vld [vmem:[%s788 + $0x2c] sm:$0xf]
      %v801 = vld [vmem:[%s788 + $0x30] sm:$0xf]
      %v802 = vld [vmem:[%s788 + $0x34] sm:$0xf]
      %v803 = vld [vmem:[%s788 + $0x38] sm:$0xf]
      %v804 = vld [vmem:[%s788 + $0x3c] sm:$0xf]
      %v821 = vunpack.c.l.b16 %v789
      %v822 = vunpack.c.l.b16 %v790
      %v823 = vunpack.c.l.b16 %v791
      %v824 = vunpack.c.l.b16 %v792
      %v825 = vunpack.c.l.b16 %v793
      %v826 = vunpack.c.l.b16 %v794
      %v827 = vunpack.c.l.b16 %v795
      %v828 = vunpack.c.l.b16 %v796
      %v829 = vunpack.c.l.b16 %v797
      %v830 = vunpack.c.l.b16 %v798
      %v831 = vunpack.c.l.b16 %v799
      %v832 = vunpack.c.l.b16 %v800
      %v833 = vunpack.c.l.b16 %v801
      %v834 = vunpack.c.l.b16 %v802
      %v835 = vunpack.c.l.b16 %v803
      %v836 = vunpack.c.l.b16 %v804
      %v837 = vpack.c.b16 %v822, %v821
      %v838 = vpack.c.b16 %v824, %v823
      %v839 = vpack.c.b16 %v826, %v825
      %v840 = vpack.c.b16 %v828, %v827
      %v841 = vpack.c.b16 %v830, %v829
      %v842 = vpack.c.b16 %v832, %v831
      %v843 = vpack.c.b16 %v834, %v833
      %v844 = vpack.c.b16 %v836, %v835
      %v846 = vsel %vm453, %v837, 0
      %v849 = vsel %vm453, %v838, 0
      %v852 = vsel %vm453, %v839, 0
      %v855 = vsel %vm453, %v840, 0
      %v858 = vsel %vm453, %v841, 0
      %v861 = vsel %vm453, %v842, 0
      %v864 = vsel %vm453, %v843, 0
      %v867 = vsel %vm453, %v844, 0
      %869 = vmatpush.bf16.msra.mxu0 0
      %870 = vmatpush.bf16.msra.mxu0 0
      %871 = vmatpush.bf16.msra.mxu0 0
      %872 = vmatpush.bf16.msra.mxu0 0
      %873 = vmatpush.bf16.msra.mxu0 0
      %874 = vmatpush.bf16.msra.mxu0 0
      %875 = vmatpush.bf16.msra.mxu0 %v786
      %876 = vmatpush.bf16.msra.mxu0 %v784
      %877 = vmatmul.bf16.gmra.mxu0 %v846
      %v878 = vpop.f32.mrf.mxu0
      %v879 = vadd.f32 0.0, %v878
      %v880 = vpop.f32.mrf.mxu0
      %v881 = vadd.f32 0.0, %v880
      %882 = vmatmul.bf16.gmra.mxu0 %v849
      %v883 = vpop.f32.mrf.mxu0
      %v884 = vadd.f32 0.0, %v883
      %v885 = vpop.f32.mrf.mxu0
      %v886 = vadd.f32 0.0, %v885
      %887 = vmatmul.bf16.gmra.mxu0 %v852
      %v888 = vpop.f32.mrf.mxu0
      %v889 = vadd.f32 0.0, %v888
      %v890 = vpop.f32.mrf.mxu0
      %v891 = vadd.f32 0.0, %v890
      %892 = vmatmul.bf16.gmra.mxu0 %v855
      %v893 = vpop.f32.mrf.mxu0
      %v894 = vadd.f32 0.0, %v893
      %v895 = vpop.f32.mrf.mxu0
      %v896 = vadd.f32 0.0, %v895
      %897 = vmatmul.bf16.gmra.mxu0 %v858
      %v898 = vpop.f32.mrf.mxu0
      %v899 = vadd.f32 0.0, %v898
      %v900 = vpop.f32.mrf.mxu0
      %v901 = vadd.f32 0.0, %v900
      %902 = vmatmul.bf16.gmra.mxu0 %v861
      %v903 = vpop.f32.mrf.mxu0
      %v904 = vadd.f32 0.0, %v903
      %v905 = vpop.f32.mrf.mxu0
      %v906 = vadd.f32 0.0, %v905
      %907 = vmatmul.bf16.gmra.mxu0 %v864
      %v908 = vpop.f32.mrf.mxu0
      %v909 = vadd.f32 0.0, %v908
      %v910 = vpop.f32.mrf.mxu0
      %v911 = vadd.f32 0.0, %v910
      %912 = vmatmul.bf16.gmra.mxu0 %v867
      %v913 = vpop.f32.mrf.mxu0
      %v914 = vadd.f32 0.0, %v913
      %v915 = vpop.f32.mrf.mxu0
      %v916 = vadd.f32 0.0, %v915
      %917 = vdwg.mxu0
      %918 = vmatpush.bf16.msra.mxu0 0
      %919 = vmatpush.bf16.msra.mxu0 0
      %920 = vmatpush.bf16.msra.mxu0 0
      %921 = vmatpush.bf16.msra.mxu0 0
      %922 = vmatpush.bf16.msra.mxu0 0
      %923 = vmatpush.bf16.msra.mxu0 0
      %924 = vmatpush.bf16.msra.mxu0 %v787
      %925 = vmatpush.bf16.msra.mxu0 %v785
      %926 = vmatmul.bf16.gmra.mxu0 %v846
      %v927 = vpop.f32.mrf.mxu0
      %v928 = vadd.f32 0.0, %v927
      %v929 = vpop.f32.mrf.mxu0
      %v930 = vadd.f32 0.0, %v929
      %931 = vmatmul.bf16.gmra.mxu0 %v849
      %v932 = vpop.f32.mrf.mxu0
      %v933 = vadd.f32 0.0, %v932
      %v934 = vpop.f32.mrf.mxu0
      %v935 = vadd.f32 0.0, %v934
      %936 = vmatmul.bf16.gmra.mxu0 %v852
      %v937 = vpop.f32.mrf.mxu0
      %v938 = vadd.f32 0.0, %v937
      %v939 = vpop.f32.mrf.mxu0
      %v940 = vadd.f32 0.0, %v939
      %941 = vmatmul.bf16.gmra.mxu0 %v855
      %v942 = vpop.f32.mrf.mxu0
      %v943 = vadd.f32 0.0, %v942
      %v944 = vpop.f32.mrf.mxu0
      %v945 = vadd.f32 0.0, %v944
      %946 = vmatmul.bf16.gmra.mxu0 %v858
      %v947 = vpop.f32.mrf.mxu0
      %v948 = vadd.f32 0.0, %v947
      %v949 = vpop.f32.mrf.mxu0
      %v950 = vadd.f32 0.0, %v949
      %951 = vmatmul.bf16.gmra.mxu0 %v861
      %v952 = vpop.f32.mrf.mxu0
      %v953 = vadd.f32 0.0, %v952
      %v954 = vpop.f32.mrf.mxu0
      %v955 = vadd.f32 0.0, %v954
      %956 = vmatmul.bf16.gmra.mxu0 %v864
      %v957 = vpop.f32.mrf.mxu0
      %v958 = vadd.f32 0.0, %v957
      %v959 = vpop.f32.mrf.mxu0
      %v960 = vadd.f32 0.0, %v959
      %961 = vmatmul.bf16.gmra.mxu0 %v867
      %v962 = vpop.f32.mrf.mxu0
      %v963 = vadd.f32 0.0, %v962
      %v964 = vpop.f32.mrf.mxu0
      %v965 = vadd.f32 0.0, %v964
      %966 = vdwg.mxu0
      %v967 = vsub.f32 0.0, %v879
      %v968 = vsub.f32 0.0, %v928
      %v969 = vsub.f32 0.0, %v881
      %v970 = vsub.f32 0.0, %v930
      %v971 = vsub.f32 0.0, %v884
      %v972 = vsub.f32 0.0, %v933
      %v973 = vsub.f32 0.0, %v886
      %v974 = vsub.f32 0.0, %v935
      %v975 = vsub.f32 0.0, %v889
      %v976 = vsub.f32 0.0, %v938
      %v977 = vsub.f32 0.0, %v891
      %v978 = vsub.f32 0.0, %v940
      %v979 = vsub.f32 0.0, %v894
      %v980 = vsub.f32 0.0, %v943
      %v981 = vsub.f32 0.0, %v896
      %v982 = vsub.f32 0.0, %v945
      %v983 = vsub.f32 0.0, %v899
      %v984 = vsub.f32 0.0, %v948
      %v985 = vsub.f32 0.0, %v901
      %v986 = vsub.f32 0.0, %v950
      %v987 = vsub.f32 0.0, %v904
      %v988 = vsub.f32 0.0, %v953
      %v989 = vsub.f32 0.0, %v906
      %v990 = vsub.f32 0.0, %v955
      %v991 = vsub.f32 0.0, %v909
      %v992 = vsub.f32 0.0, %v958
      %v993 = vsub.f32 0.0, %v911
      %v994 = vsub.f32 0.0, %v960
      %v995 = vsub.f32 0.0, %v914
      %v996 = vsub.f32 0.0, %v963
      %v997 = vsub.f32 0.0, %v916
      %v998 = vsub.f32 0.0, %v965
      %v999 = vmul.f32 %v967, 1.442695
      %v1000 = vpow.pop %v999
      %v1001 = vmul.f32 %v968, 1.442695
      %v1002 = vpow.pop %v1001
      %v1003 = vmul.f32 %v969, 1.442695
      %v1004 = vpow.pop %v1003
      %v1005 = vmul.f32 %v970, 1.442695
      %v1006 = vpow.pop %v1005
      %v1007 = vmul.f32 %v971, 1.442695
      %v1008 = vpow.pop %v1007
      %v1009 = vmul.f32 %v972, 1.442695
      %v1010 = vpow.pop %v1009
      %v1011 = vmul.f32 %v973, 1.442695
      %v1012 = vpow.pop %v1011
      %v1013 = vmul.f32 %v974, 1.442695
      %v1014 = vpow.pop %v1013
      %v1015 = vmul.f32 %v975, 1.442695
      %v1016 = vpow.pop %v1015
      %v1017 = vmul.f32 %v976, 1.442695
      %v1018 = vpow.pop %v1017
      %v1019 = vmul.f32 %v977, 1.442695
      %v1020 = vpow.pop %v1019
      %v1021 = vmul.f32 %v978, 1.442695
      %v1022 = vpow.pop %v1021
      %v1023 = vmul.f32 %v979, 1.442695
      %v1024 = vpow.pop %v1023
      %v1025 = vmul.f32 %v980, 1.442695
      %v1026 = vpow.pop %v1025
      %v1027 = vmul.f32 %v981, 1.442695
      %v1028 = vpow.pop %v1027
      %v1029 = vmul.f32 %v982, 1.442695
      %v1030 = vpow.pop %v1029
      %v1031 = vmul.f32 %v983, 1.442695
      %v1032 = vpow.pop %v1031
      %v1033 = vmul.f32 %v984, 1.442695
      %v1034 = vpow.pop %v1033
      %v1035 = vmul.f32 %v985, 1.442695
      %v1036 = vpow.pop %v1035
      %v1037 = vmul.f32 %v986, 1.442695
      %v1038 = vpow.pop %v1037
      %v1039 = vmul.f32 %v987, 1.442695
      %v1040 = vpow.pop %v1039
      %v1041 = vmul.f32 %v988, 1.442695
      %v1042 = vpow.pop %v1041
      %v1043 = vmul.f32 %v989, 1.442695
      %v1044 = vpow.pop %v1043
      %v1045 = vmul.f32 %v990, 1.442695
      %v1046 = vpow.pop %v1045
      %v1047 = vmul.f32 %v991, 1.442695
      %v1048 = vpow.pop %v1047
      %v1049 = vmul.f32 %v992, 1.442695
      %v1050 = vpow.pop %v1049
      %v1051 = vmul.f32 %v993, 1.442695
      %v1052 = vpow.pop %v1051
      %v1053 = vmul.f32 %v994, 1.442695
      %v1054 = vpow.pop %v1053
      %v1055 = vmul.f32 %v995, 1.442695
      %v1056 = vpow.pop %v1055
      %v1057 = vmul.f32 %v996, 1.442695
      %v1058 = vpow.pop %v1057
      %v1059 = vmul.f32 %v997, 1.442695
      %v1060 = vpow.pop %v1059
      %v1061 = vmul.f32 %v998, 1.442695
      %v1062 = vpow.pop %v1061
      %v1063 = vadd.f32 %v1000, 1.0
      %v1064 = vadd.f32 %v1002, 1.0
      %v1065 = vadd.f32 %v1004, 1.0
      %v1066 = vadd.f32 %v1006, 1.0
      %v1067 = vadd.f32 %v1008, 1.0
      %v1068 = vadd.f32 %v1010, 1.0
      %v1069 = vadd.f32 %v1012, 1.0
      %v1070 = vadd.f32 %v1014, 1.0
      %v1071 = vadd.f32 %v1016, 1.0
      %v1072 = vadd.f32 %v1018, 1.0
      %v1073 = vadd.f32 %v1020, 1.0
      %v1074 = vadd.f32 %v1022, 1.0
      %v1075 = vadd.f32 %v1024, 1.0
      %v1076 = vadd.f32 %v1026, 1.0
      %v1077 = vadd.f32 %v1028, 1.0
      %v1078 = vadd.f32 %v1030, 1.0
      %v1079 = vadd.f32 %v1032, 1.0
      %v1080 = vadd.f32 %v1034, 1.0
      %v1081 = vadd.f32 %v1036, 1.0
      %v1082 = vadd.f32 %v1038, 1.0
      %v1083 = vadd.f32 %v1040, 1.0
      %v1084 = vadd.f32 %v1042, 1.0
      %v1085 = vadd.f32 %v1044, 1.0
      %v1086 = vadd.f32 %v1046, 1.0
      %v1087 = vadd.f32 %v1048, 1.0
      %v1088 = vadd.f32 %v1050, 1.0
      %v1089 = vadd.f32 %v1052, 1.0
      %v1090 = vadd.f32 %v1054, 1.0
      %v1091 = vadd.f32 %v1056, 1.0
      %v1092 = vadd.f32 %v1058, 1.0
      %v1093 = vadd.f32 %v1060, 1.0
      %v1094 = vadd.f32 %v1062, 1.0
      %v1095 = vrcp.pop %v1063
      %v1096 = vrcp.pop %v1064
      %v1097 = vrcp.pop %v1065
      %v1098 = vrcp.pop %v1066
      %v1099 = vrcp.pop %v1067
      %v1100 = vrcp.pop %v1068
      %v1101 = vrcp.pop %v1069
      %v1102 = vrcp.pop %v1070
      %v1103 = vrcp.pop %v1071
      %v1104 = vrcp.pop %v1072
      %v1105 = vrcp.pop %v1073
      %v1106 = vrcp.pop %v1074
      %v1107 = vrcp.pop %v1075
      %v1108 = vrcp.pop %v1076
      %v1109 = vrcp.pop %v1077
      %v1110 = vrcp.pop %v1078
      %v1111 = vrcp.pop %v1079
      %v1112 = vrcp.pop %v1080
      %v1113 = vrcp.pop %v1081
      %v1114 = vrcp.pop %v1082
      %v1115 = vrcp.pop %v1083
      %v1116 = vrcp.pop %v1084
      %v1117 = vrcp.pop %v1085
      %v1118 = vrcp.pop %v1086
      %v1119 = vrcp.pop %v1087
      %v1120 = vrcp.pop %v1088
      %v1121 = vrcp.pop %v1089
      %v1122 = vrcp.pop %v1090
      %v1123 = vrcp.pop %v1091
      %v1124 = vrcp.pop %v1092
      %v1125 = vrcp.pop %v1093
      %v1126 = vrcp.pop %v1094
      %v1127 = vadd.f32 %v736, %v1095
      %v1128 = vadd.f32 %v737, %v1096
      %v1129 = vadd.f32 %v738, %v1097
      %v1130 = vadd.f32 %v739, %v1098
      %v1131 = vadd.f32 %v740, %v1099
      %v1132 = vadd.f32 %v741, %v1100
      %v1133 = vadd.f32 %v742, %v1101
      %v1134 = vadd.f32 %v743, %v1102
      %v1135 = vadd.f32 %v744, %v1103
      %v1136 = vadd.f32 %v745, %v1104
      %v1137 = vadd.f32 %v746, %v1105
      %v1138 = vadd.f32 %v747, %v1106
      %v1139 = vadd.f32 %v748, %v1107
      %v1140 = vadd.f32 %v749, %v1108
      %v1141 = vadd.f32 %v750, %v1109
      %v1142 = vadd.f32 %v751, %v1110
      %v1143 = vadd.f32 %v752, %v1111
      %v1144 = vadd.f32 %v753, %v1112
      %v1145 = vadd.f32 %v754, %v1113
      %v1146 = vadd.f32 %v755, %v1114
      %v1147 = vadd.f32 %v756, %v1115
      %v1148 = vadd.f32 %v757, %v1116
      %v1149 = vadd.f32 %v758, %v1117
      %v1150 = vadd.f32 %v759, %v1118
      %v1151 = vadd.f32 %v760, %v1119
      %v1152 = vadd.f32 %v761, %v1120
      %v1153 = vadd.f32 %v762, %v1121
      %v1154 = vadd.f32 %v763, %v1122
      %v1155 = vadd.f32 %v764, %v1123
      %v1156 = vadd.f32 %v765, %v1124
      %v1157 = vadd.f32 %v766, %v1125
      %v1158 = vadd.f32 %v767, %v1126
      %v1159 = vmul.f32 %v211, %v1127
      %v1160 = vmul.f32 %v212, %v1128
      %v1161 = vmul.f32 %v213, %v1129
      %v1162 = vmul.f32 %v214, %v1130
      %v1163 = vmul.f32 %v215, %v1131
      %v1164 = vmul.f32 %v216, %v1132
      %v1165 = vmul.f32 %v217, %v1133
      %v1166 = vmul.f32 %v218, %v1134
      %v1167 = vmul.f32 %v219, %v1135
      %v1168 = vmul.f32 %v220, %v1136
      %v1169 = vmul.f32 %v221, %v1137
      %v1170 = vmul.f32 %v222, %v1138
      %v1171 = vmul.f32 %v223, %v1139
      %v1172 = vmul.f32 %v224, %v1140
      %v1173 = vmul.f32 %v225, %v1141
      %v1174 = vmul.f32 %v226, %v1142
      %v1175 = vmul.f32 %v227, %v1143
      %v1176 = vmul.f32 %v228, %v1144
      %v1177 = vmul.f32 %v229, %v1145
      %v1178 = vmul.f32 %v230, %v1146
      %v1179 = vmul.f32 %v231, %v1147
      %v1180 = vmul.f32 %v232, %v1148
      %v1181 = vmul.f32 %v233, %v1149
      %v1182 = vmul.f32 %v234, %v1150
      %v1183 = vmul.f32 %v235, %v1151
      %v1184 = vmul.f32 %v236, %v1152
      %v1185 = vmul.f32 %v237, %v1153
      %v1186 = vmul.f32 %v238, %v1154
      %v1187 = vmul.f32 %v239, %v1155
      %v1188 = vmul.f32 %v240, %v1156
      %v1189 = vmul.f32 %v241, %v1157
      %v1190 = vmul.f32 %v242, %v1158
      %v1191 = vmul.f32 %v1159, 0.5
      %v1192 = vmul.f32 %v1160, 0.5
      %v1193 = vmul.f32 %v1161, 0.5
      %v1194 = vmul.f32 %v1162, 0.5
      %v1195 = vmul.f32 %v1163, 0.5
      %v1196 = vmul.f32 %v1164, 0.5
      %v1197 = vmul.f32 %v1165, 0.5
      %v1198 = vmul.f32 %v1166, 0.5
      %v1199 = vmul.f32 %v1167, 0.5
      %v1200 = vmul.f32 %v1168, 0.5
      %v1201 = vmul.f32 %v1169, 0.5
      %v1202 = vmul.f32 %v1170, 0.5
      %v1203 = vmul.f32 %v1171, 0.5
      %v1204 = vmul.f32 %v1172, 0.5
      %v1205 = vmul.f32 %v1173, 0.5
      %v1206 = vmul.f32 %v1174, 0.5
      %v1207 = vmul.f32 %v1175, 0.5
      %v1208 = vmul.f32 %v1176, 0.5
      %v1209 = vmul.f32 %v1177, 0.5
      %v1210 = vmul.f32 %v1178, 0.5
      %v1211 = vmul.f32 %v1179, 0.5
      %v1212 = vmul.f32 %v1180, 0.5
      %v1213 = vmul.f32 %v1181, 0.5
      %v1214 = vmul.f32 %v1182, 0.5
      %v1215 = vmul.f32 %v1183, 0.5
      %v1216 = vmul.f32 %v1184, 0.5
      %v1217 = vmul.f32 %v1185, 0.5
      %v1218 = vmul.f32 %v1186, 0.5
      %v1219 = vmul.f32 %v1187, 0.5
      %v1220 = vmul.f32 %v1188, 0.5
      %v1221 = vmul.f32 %v1189, 0.5
      %v1222 = vmul.f32 %v1190, 0.5
      %1223 = vst [vmem:[%s208] sm:$0xff] %v1191
      %1224 = vst [vmem:[%s208 + $0x8] sm:$0xff] %v1192
      %1225 = vst [vmem:[%s208 + $0x10] sm:$0xff] %v1193
      %1226 = vst [vmem:[%s208 + $0x18] sm:$0xff] %v1194
      %1227 = vst [vmem:[%s208 + $0x20] sm:$0xff] %v1195
      %1228 = vst [vmem:[%s208 + $0x28] sm:$0xff] %v1196
      %1229 = vst [vmem:[%s208 + $0x30] sm:$0xff] %v1197
      %1230 = vst [vmem:[%s208 + $0x38] sm:$0xff] %v1198
      %1231 = vst [vmem:[%s208 + $0x40] sm:$0xff] %v1199
      %1232 = vst [vmem:[%s208 + $0x48] sm:$0xff] %v1200
      %1233 = vst [vmem:[%s208 + $0x50] sm:$0xff] %v1201
      %1234 = vst [vmem:[%s208 + $0x58] sm:$0xff] %v1202
      %1235 = vst [vmem:[%s208 + $0x60] sm:$0xff] %v1203
      %1236 = vst [vmem:[%s208 + $0x68] sm:$0xff] %v1204
      %1237 = vst [vmem:[%s208 + $0x70] sm:$0xff] %v1205
      %1238 = vst [vmem:[%s208 + $0x78] sm:$0xff] %v1206
      %1239 = vst [vmem:[%s208 + $0x80] sm:$0xff] %v1207
      %1240 = vst [vmem:[%s208 + $0x88] sm:$0xff] %v1208
      %1241 = vst [vmem:[%s208 + $0x90] sm:$0xff] %v1209
      %1242 = vst [vmem:[%s208 + $0x98] sm:$0xff] %v1210
      %1243 = vst [vmem:[%s208 + $0xa0] sm:$0xff] %v1211
      %1244 = vst [vmem:[%s208 + $0xa8] sm:$0xff] %v1212
      %1245 = vst [vmem:[%s208 + $0xb0] sm:$0xff] %v1213
      %1246 = vst [vmem:[%s208 + $0xb8] sm:$0xff] %v1214
      %1247 = vst [vmem:[%s208 + $0xc0] sm:$0xff] %v1215
      %1248 = vst [vmem:[%s208 + $0xc8] sm:$0xff] %v1216
      %1249 = vst [vmem:[%s208 + $0xd0] sm:$0xff] %v1217
      %1250 = vst [vmem:[%s208 + $0xd8] sm:$0xff] %v1218
      %1251 = vst [vmem:[%s208 + $0xe0] sm:$0xff] %v1219
      %1252 = vst [vmem:[%s208 + $0xe8] sm:$0xff] %v1220
      %1253 = vst [vmem:[%s208 + $0xf0] sm:$0xff] %v1221
      %1254 = vst [vmem:[%s208 + $0xf8] sm:$0xff] %v1222
      %s1255 = smul.u32 2, %s19
      %p1256 = scmp.lt.s32.totalorder %s18, 1
      %s1257 = scalar_select %p1256, %s18, 1
      %p1258 = scmp.lt.s32.totalorder %s1255, 1
      %s1259 = scalar_select %p1258, %s1255, 1
      %s1260 = smul.addr %s1257, 32
      %s1261 = sadd.s32 %s1259, %s1260
      %s1262 = smul.addr %s1261, 8
      %s1263 = scalar_lea.vmem %s3, %s1262
      // Predicated region
      $region33: #{pcb_highdiv_forward.1} parent=31 // pred_check
        %p1264 = pneg %p116
      $region34: #{pcb_highdiv_forward.1} parent=31 // pred_check_branch
        %1266 = sbr.rel (%p1264) target = $region36
      $region35: #{pcb_highdiv_forward.1} parent=31 // pred_region
        %s1267 = smul.u32 2, %s19
      $region36: #{pcb_highdiv_forward.1} parent=31 // pred_fallthru
        _
    $region32: #{pcb_highdiv_forward.1} parent=5 // pred_fallthru
      _
    %p1268 = scmp.le.s32.totalorder 2, %s9
    // Predicated region
    $region37: #{pcb_highdiv_forward.1} parent=5 // pred_check
      %p1269 = pneg %p1268
    $region38: #{pcb_highdiv_forward.1} parent=5 // pred_check_branch
      %1271 = sbr.rel (%p1269) target = $region40
    $region39: #{pcb_highdiv_forward.1} parent=5 // pred_region
      %s1272 = ssub.s32 %s9, 2
      // Predicated region
      $region41: #{pcb_highdiv_forward.1} parent=39 // pred_check
        %p1273 = pneg %p122
      $region42: #{pcb_highdiv_forward.1} parent=39 // pred_check_branch
        %1275 = sbr.rel (%p1273) target = $region44
      $region43: #{pcb_highdiv_forward.1} parent=39 // pred_region
        %s1276 = smul.u32 2, %s21
        %p1277 = scmp.lt.s32.totalorder %s20, 1
        %s1278 = scalar_select %p1277, %s20, 1
        %p1279 = scmp.lt.s32.totalorder %s1276, 1
        %s1280 = scalar_select %p1279, %s1276, 1
        %s1281 = smul.addr %s1278, 32
        %s1282 = sadd.s32 %s1280, %s1281
        %s1283 = smul.addr %s1282, 8
        %s1284 = scalar_lea.vmem %s3, %s1283
      $region44: #{pcb_highdiv_forward.1} parent=39 // pred_fallthru
        _
    $region40: #{pcb_highdiv_forward.1} parent=5 // pred_fallthru
      _
  $region6: #{pcb_highdiv_forward.1} parent=0 // loop_footer
    %s13 = sadd.s32 1, %s9
  $region7: #{pcb_highdiv_forward.1} parent=0 // loop_footer_branch
    %8 = sbr.rel target = $region3
  $region8: #{pcb_highdiv_forward.1} parent=0 // loop_exit
    _

</llo_original>
